<compile_context>
chip_gen: v5e
topology: v5e:2x2
jax: 0.10.0
libtpu: 0.0.40
codegen_flags: <defaults>
</compile_context>

<pallas_src>
import jax
import jax.numpy as jnp
from jax.experimental import pallas as pl
from jax.experimental.pallas import tpu as pltpu

HIDDEN = 256

# Per-grid-step VMEM budget used to derive the batch tile (double-buffered
# state tile + live f32 hidden + resident weights).  Kept well below the
# explicit scoped-VMEM limit requested below and below v7x's 64 MiB physical.
_TILE_VMEM_BUDGET = 28 * 1024 * 1024
# Explicit scoped-VMEM limit: above v5e's 16 MiB default, below v7x's 64 MiB
# physical VMEM per TensorCore.
_VMEM_LIMIT_BYTES = 48 * 1024 * 1024
_MAX_BLOCK_B = 8192


def _round_up(x, m):
    return -(-x // m) * m


def _pick_block_b(state_dim, state_itemsize):
    """Largest batch tile (multiple of 128 lanes) that fits the VMEM budget."""
    s_sub = _round_up(state_dim, 8)       # sublane-padded S of the state tile
    s_lane = _round_up(state_dim, 128)    # lane-padded S of the resident W1
    # W1 has a constant index map (VMEM-resident) but is still double-buffered
    # by the pipeline; charge it against the budget up front.
    resident = 2 * HIDDEN * s_lane * 4
    budget = max(_TILE_VMEM_BUDGET - resident, 4 * 1024 * 1024)
    # Per batch column: double-buffered state column + ~2x live f32 hidden
    # column (margin for compiler temporaries around the matmul / ReLU).
    per_col = 2 * s_sub * state_itemsize + 2 * HIDDEN * 4
    tb = (budget // per_col) // 128 * 128
    return int(max(128, min(_MAX_BLOCK_B, tb)))


def _critic_kernel(xt_ref, w1_ref, b1_ref, w2_ref, b2_ref, out_ref):
    # Layer 1 on the MXU: hT[256, TB] = W1[256, S] @ xT[S, TB], f32 accumulation.
    # Mosaic's default f32 matmul (multi-pass MXU) is used deliberately; forcing
    # Precision.HIGHEST would add MXU passes the critic does not need (verified
    # against a HIGHEST reference in the test below).
    ht = jnp.dot(w1_ref[...], xt_ref[...], preferred_element_type=jnp.float32)
    ht = jnp.maximum(ht + b1_ref[...], 0.0)          # b1 is [256, 1], lane-broadcast
    # Layer 2: qT[1, TB] = W2[1, 256] @ hT -- a well-shaped 256-deep contraction
    # whose [1, TB] result is lane-dense.
    q = jnp.dot(w2_ref[...], ht, preferred_element_type=jnp.float32)
    q = jnp.maximum(q + b2_ref[0], 0.0)              # final ReLU (per module spec)
    out_ref[...] = q.astype(out_ref.dtype)


def dnn_critic_forward(state, w1, b1, w2, b2, *, block_b=None, use_bf16=False):
    """DNN_Critic forward: state [B, S] float32 -> q_value [B, 1] float32.

    w1: [256, S]   (l1.weight, native PyTorch layout)
    b1: [256]
    w2: [1, 256]   (l2.weight, native PyTorch layout)
    b2: [1]
    use_bf16: opt-in cast of state/W1 to bfloat16 (halves the HBM state stream;
      MXU still accumulates in f32; bias/ReLU stay f32; numerics change slightly).
    """
    B, S = state.shape
    assert w1.shape == (HIDDEN, S)
    assert w2.shape == (1, HIDDEN)

    # Batch-on-lanes: the kernel sees the state as xT[S, B] so both the state
    # tile and the (1, TB) output block are lane-dense.  Callers on a hot path
    # can keep the state batch-minor in HBM to avoid this wrapper transpose.
    x_t = jnp.transpose(state)
    if use_bf16:
        x_t = x_t.astype(jnp.bfloat16)
        w1 = w1.astype(jnp.bfloat16)

    if block_b is None:
        block_b = _pick_block_b(S, x_t.dtype.itemsize)
    else:
        block_b = max(128, (int(block_b) // 128) * 128)

    if B < 256:
        # Single full-extent tile (always a legal block shape); small batches
        # don't amortize a split.
        tb = B
        b_pad = B
    else:
        # At least two batch tiles so both v7x TensorCores get work
        # (no-op cost on single-TC v5e/v6e).
        tb = min(block_b, _round_up(pl.cdiv(B, 2), 128))
        b_pad = _round_up(B, tb)

    if b_pad != B:
        x_t = jnp.pad(x_t, ((0, 0), (0, b_pad - B)))

    b1_col = b1.reshape(HIDDEN, 1)   # sublane-aligned bias for hT[256, TB]
    b2_1d = b2.reshape(1)

    out = pl.pallas_call(
        _critic_kernel,
        out_shape=jax.ShapeDtypeStruct((1, b_pad), jnp.float32),
        grid_spec=pltpu.PrefetchScalarGridSpec(
            num_scalar_prefetch=0,
            grid=(b_pad // tb,),
            in_specs=[
                # state (transposed): tiled along batch lanes -> pipelined DMA,
                # full 128-lane vregs regardless of state_dim.
                pl.BlockSpec((S, tb), lambda i: (0, i)),
                # weights / biases: constant index maps -> VMEM-resident.
                pl.BlockSpec((HIDDEN, S), lambda i: (0, 0)),
                pl.BlockSpec((HIDDEN, 1), lambda i: (0, 0)),
                pl.BlockSpec((1, HIDDEN), lambda i: (0, 0)),
                # b2 is a single scalar: SMEM, not a padded (8,128) VMEM tile.
                pl.BlockSpec(memory_space=pltpu.MemorySpace.SMEM),
            ],
            out_specs=pl.BlockSpec((1, tb), lambda i: (0, i)),
        ),
        compiler_params=pltpu.CompilerParams(
            # Independent batch tiles: shard across both TCs on v7x.
            dimension_semantics=("parallel",),
            vmem_limit_bytes=_VMEM_LIMIT_BYTES,
        ),
    )(x_t, w1, b1_col, w2, b2_1d)

    return out[0, :B][:, None]


def init_params(key, state_dim):
    """Deterministic init mimicking torch.nn.Linear defaults (uniform +/- 1/sqrt(fan_in)),
    with the weights kept in their native PyTorch layouts."""
    k1, k2, k3, k4 = jax.random.split(key, 4)
    bound1 = 1.0 / jnp.sqrt(jnp.float32(state_dim))
    bound2 = 1.0 / jnp.sqrt(jnp.float32(HIDDEN))
    w1 = jax.random.uniform(k1, (HIDDEN, state_dim), jnp.float32, -bound1, bound1)
    b1 = jax.random.uniform(k2, (HIDDEN,), jnp.float32, -bound1, bound1)
    w2 = jax.random.uniform(k3, (1, HIDDEN), jnp.float32, -bound2, bound2)
    b2 = jax.random.uniform(k4, (1,), jnp.float32, -bound2, bound2)
    return w1, b1, w2, b2


def reference_forward(state, w1, b1, w2, b2):
    h = jnp.maximum(
        jnp.dot(state, w1.T, precision=jax.lax.Precision.HIGHEST) + b1[None, :], 0.0)
    q = jnp.maximum(
        jnp.dot(h, w2.T, precision=jax.lax.Precision.HIGHEST) + b2[None, :], 0.0)
    return q


if __name__ == "__main__":
    key = jax.random.PRNGKey(0)
    k_param, k_s1, k_s2 = jax.random.split(key, 3)

    state_dim = 32
    w1, b1, w2, b2 = init_params(k_param, state_dim)

    # Small single-tile case (whole batch in one full-extent block).
    state_small = jax.random.normal(k_s1, (8, state_dim), jnp.float32)
    q_small = jax.block_until_ready(dnn_critic_forward(state_small, w1, b1, w2, b2))
    q_small_ref = reference_forward(state_small, w1, b1, w2, b2)
    assert q_small.shape == (8, 1)
    assert jnp.allclose(q_small, q_small_ref, atol=1e-3, rtol=1e-3)

    # Multi-tile case: B=300 >= 256 forces >= 2 tiles; block_b=128 gives 3 tiles
    # of 128 lanes with 84 padded batch columns (exercises padding + grid).
    state_multi = jax.random.normal(k_s2, (300, state_dim), jnp.float32)
    q_multi = jax.block_until_ready(
        dnn_critic_forward(state_multi, w1, b1, w2, b2, block_b=128))
    q_multi_ref = reference_forward(state_multi, w1, b1, w2, b2)
    assert q_multi.shape == (300, 1)
    assert jnp.allclose(q_multi, q_multi_ref, atol=1e-3, rtol=1e-3)

    # Opt-in bf16 state/W1 path (looser tolerance: bf16 rounding on layer 1).
    q_bf16 = jax.block_until_ready(
        dnn_critic_forward(state_multi, w1, b1, w2, b2, block_b=128, use_bf16=True))
    assert q_bf16.shape == (300, 1)
    assert jnp.allclose(q_bf16, q_multi_ref, atol=1e-1, rtol=1e-1)

    print("KERNEL_OK")
</pallas_src>

<mosaic_0001>
module attributes {stable_mosaic.version = 11 : i64} {
  func.func @_critic_kernel(%arg0: i32, %arg1: memref<32x8xf32, #tpu.memory_space<vmem>>, %arg2: memref<256x32xf32, #tpu.memory_space<vmem>>, %arg3: memref<256x1xf32, #tpu.memory_space<vmem>>, %arg4: memref<1x256xf32, #tpu.memory_space<vmem>>, %arg5: memref<1xf32, #tpu.memory_space<smem>>, %arg6: memref<1x8xf32, #tpu.memory_space<vmem>>) attributes {dimension_semantics = [#tpu.dimension_semantics<parallel>], iteration_bounds = array<i64: 1>, scalar_prefetch = 0 : i64, scratch_operands = 0 : i64, tpu.core_type = #tpu.core_type<tc>, window_params = [{transform_indices = @transform_0, window_bounds = array<i64: 32, 8>}, {pipeline_mode = #tpu.pipeline_mode<synchronous>, transform_indices = @transform_1, window_bounds = array<i64: 256, 32>}, {pipeline_mode = #tpu.pipeline_mode<synchronous>, transform_indices = @transform_2, window_bounds = array<i64: 256, 1>}, {pipeline_mode = #tpu.pipeline_mode<synchronous>, transform_indices = @transform_3, window_bounds = array<i64: 1, 256>}, {transform_indices = @transform_4, window_bounds = array<i64: 1>}, {transform_indices = @transform_5, window_bounds = array<i64: 1, 8>}]} {
    %c0 = arith.constant 0 : index
    %c0_0 = arith.constant 0 : index
    %0 = vector.load %arg2[%c0, %c0_0] : memref<256x32xf32, #tpu.memory_space<vmem>>, vector<256x32xf32>
    %c0_1 = arith.constant 0 : index
    %c0_2 = arith.constant 0 : index
    %1 = vector.load %arg1[%c0_1, %c0_2] : memref<32x8xf32, #tpu.memory_space<vmem>>, vector<32x8xf32>
    %cst = arith.constant dense<0.000000e+00> : vector<256x8xf32>
    %2 = tpu.matmul %0, %1, %cst {dimension_numbers = #tpu.dot_dimension_numbers<[1], [0], [0], [1], [0, 0, 1, 1], [], []>} : vector<256x32xf32>, vector<32x8xf32>, vector<256x8xf32> -> vector<256x8xf32>
    %c0_3 = arith.constant 0 : index
    %c0_4 = arith.constant 0 : index
    %3 = vector.load %arg3[%c0_3, %c0_4] : memref<256x1xf32, #tpu.memory_space<vmem>>, vector<256x1xf32>
    %4 = vector.broadcast %3 : vector<256x1xf32> to vector<256x8xf32>
    %5 = arith.addf %2, %4 : vector<256x8xf32>
    %cst_5 = arith.constant 0.000000e+00 : f32
    %6 = vector.broadcast %cst_5 : f32 to vector<256x8xf32>
    %7 = arith.maximumf %5, %6 : vector<256x8xf32>
    %c0_6 = arith.constant 0 : index
    %c0_7 = arith.constant 0 : index
    %8 = vector.load %arg4[%c0_6, %c0_7] : memref<1x256xf32, #tpu.memory_space<vmem>>, vector<1x256xf32>
    %cst_8 = arith.constant dense<0.000000e+00> : vector<1x8xf32>
    %9 = tpu.matmul %8, %7, %cst_8 {dimension_numbers = #tpu.dot_dimension_numbers<[1], [0], [0], [1], [0, 0, 1, 1], [], []>} : vector<1x256xf32>, vector<256x8xf32>, vector<1x8xf32> -> vector<1x8xf32>
    %c0_9 = arith.constant 0 : index
    %10 = memref.load %arg5[%c0_9] : memref<1xf32, #tpu.memory_space<smem>>
    %11 = vector.broadcast %10 : f32 to vector<1x8xf32>
    %12 = arith.addf %9, %11 : vector<1x8xf32>
    %cst_10 = arith.constant 0.000000e+00 : f32
    %13 = vector.broadcast %cst_10 : f32 to vector<1x8xf32>
    %14 = arith.maximumf %12, %13 : vector<1x8xf32>
    %c0_11 = arith.constant 0 : index
    %c0_12 = arith.constant 0 : index
    %15 = vector.load %arg6[%c0_11, %c0_12] : memref<1x8xf32, #tpu.memory_space<vmem>>, vector<1x8xf32>
    tpu.vector_store %arg6[%c0_11, %c0_12], %14 {strides = array<i32>} : memref<1x8xf32, #tpu.memory_space<vmem>>, vector<1x8xf32>,
    return
  }
  func.func @transform_0(%arg0: i32) -> (i32, i32) {
    %c0_i32 = arith.constant 0 : i32
    %c0_i32_0 = arith.constant 0 : i32
    return %c0_i32, %arg0 : i32, i32
  }
  func.func @transform_1(%arg0: i32) -> (i32, i32) {
    %c0_i32 = arith.constant 0 : i32
    %c0_i32_0 = arith.constant 0 : i32
    %c0_i32_1 = arith.constant 0 : i32
    return %c0_i32, %c0_i32_0 : i32, i32
  }
  func.func @transform_2(%arg0: i32) -> (i32, i32) {
    %c0_i32 = arith.constant 0 : i32
    %c0_i32_0 = arith.constant 0 : i32
    %c0_i32_1 = arith.constant 0 : i32
    return %c0_i32, %c0_i32_0 : i32, i32
  }
  func.func @transform_3(%arg0: i32) -> (i32, i32) {
    %c0_i32 = arith.constant 0 : i32
    %c0_i32_0 = arith.constant 0 : i32
    %c0_i32_1 = arith.constant 0 : i32
    return %c0_i32, %c0_i32_0 : i32, i32
  }
  func.func @transform_4(%arg0: i32) -> i32 {
    %c0_i32 = arith.constant 0 : i32
    %c0_i32_0 = arith.constant 0 : i32
    return %c0_i32 : i32
  }
  func.func @transform_5(%arg0: i32) -> (i32, i32) {
    %c0_i32 = arith.constant 0 : i32
    %c0_i32_0 = arith.constant 0 : i32
    return %c0_i32, %arg0 : i32, i32
  }
}

</mosaic_0001>

<llo_original>
// kernel: tpu_custom_call.1
$region0: #{tpu_custom_call.1}
  #allocation0 [shape = 'u32[]', space=smem, size = 0x4, offset = 0x4, fixed_abs, tag = 'smem constant byte address 0x4 - core index']
  #allocation1 [shape = 'u32[72,128]{1,0:T(1,128)}', space=vmem, size = 0x9000, scoped, tag = 'internal scratch']
  #allocation2 [shape = 'f32[1]{0:T(128)S(6)}', space=smem, size = 0x200, scoped, tag = 'scoped memory for tpu_custom_call.1']
  %s0 = inlined_call_operand.vmem [shape: f32[32,8], index: 0, kind: input, shape index: {}]
  %s1 = inlined_call_operand.vmem [shape: f32[256,32], index: 1, kind: input, shape index: {}]
  %s2 = inlined_call_operand.vmem [shape: f32[256,1], index: 2, kind: input, shape index: {}]
  %s3 = inlined_call_operand.vmem [shape: f32[1,256], index: 3, kind: input, shape index: {}]
  %s4 = inlined_call_operand.<no memory space> [shape: f32[1], index: 4, kind: input, shape index: {}]
  %s5 = inlined_call_operand.hbm [shape: f32[1,8], index: 5, kind: output, shape index: {}]
  %s6 = sld [smem:[#allocation0]]
  $region30: #{tpu_custom_call.1} parent=0
    _
  %s8 = ssub.s32 1, %s6
  %s9 = scalar_select 0, %s8, %s6
  %10 = sst [smem:[#allocation2]] %s4
  $region1: #{tpu_custom_call.1} parent=0
    #allocation3 [shape = 'u8[512]{0}', space=vmem, size = 0x400, scoped, tag = 'output window, operand 0, single buffered']
    #allocation4 [shape = 's32[1]{0}', space=sflag, size = 0x4, scoped, tag = 'scoped memory for tpu_custom_call.1']
    %11 = vsyncpa [#allocation4], 0
    // Predicated region
    $region2: #{tpu_custom_call.1} parent=1 // pred_check
      _
    $region3: #{tpu_custom_call.1} parent=1 // pred_check_branch
      %13 = sbr.rel (0) target = $region5
    $region4: #{tpu_custom_call.1} parent=1 // pred_region
      _
    $region5: #{tpu_custom_call.1} parent=1 // pred_fallthru
      _
    // Predicated region
    $region6: #{tpu_custom_call.1} parent=1 // pred_check
      _
    $region7: #{tpu_custom_call.1} parent=1 // pred_check_branch
      %15 = sbr.rel (0) target = $region9
    $region8: #{tpu_custom_call.1} parent=1 // pred_region
      _
    $region9: #{tpu_custom_call.1} parent=1 // pred_fallthru
      _
    // Predicated region
    $region10: #{tpu_custom_call.1} parent=1 // pred_check
      _
    $region11: #{tpu_custom_call.1} parent=1 // pred_check_branch
      %17 = sbr.rel (0) target = $region13
    $region12: #{tpu_custom_call.1} parent=1 // pred_region
      _
    $region13: #{tpu_custom_call.1} parent=1 // pred_fallthru
      _
    // Predicated region
    $region14: #{tpu_custom_call.1} parent=1 // pred_check
      _
    $region15: #{tpu_custom_call.1} parent=1 // pred_check_branch
      %19 = sbr.rel (0) target = $region17
    $region16: #{tpu_custom_call.1} parent=1 // pred_region
      _
    $region17: #{tpu_custom_call.1} parent=1 // pred_fallthru
      _
    // Predicated region
    $region18: #{tpu_custom_call.1} parent=1 // pred_check
      _
    $region19: #{tpu_custom_call.1} parent=1 // pred_check_branch
      %21 = sbr.rel (0) target = $region21
    $region20: #{tpu_custom_call.1} parent=1 // pred_region
      _
    $region21: #{tpu_custom_call.1} parent=1 // pred_fallthru
      _
    %v22 = vld [vmem:[%s1] sm:$0xff]
    %v23 = vld [vmem:[%s1 + $0x8] sm:$0xff]
    %v24 = vld [vmem:[%s1 + $0x10] sm:$0xff]
    %v25 = vld [vmem:[%s1 + $0x18] sm:$0xff]
    %v26 = vld [vmem:[%s1 + $0x20] sm:$0xff]
    %v27 = vld [vmem:[%s1 + $0x28] sm:$0xff]
    %v28 = vld [vmem:[%s1 + $0x30] sm:$0xff]
    %v29 = vld [vmem:[%s1 + $0x38] sm:$0xff]
    %v30 = vld [vmem:[%s1 + $0x40] sm:$0xff]
    %v31 = vld [vmem:[%s1 + $0x48] sm:$0xff]
    %v32 = vld [vmem:[%s1 + $0x50] sm:$0xff]
    %v33 = vld [vmem:[%s1 + $0x58] sm:$0xff]
    %v34 = vld [vmem:[%s1 + $0x60] sm:$0xff]
    %v35 = vld [vmem:[%s1 + $0x68] sm:$0xff]
    %v36 = vld [vmem:[%s1 + $0x70] sm:$0xff]
    %v37 = vld [vmem:[%s1 + $0x78] sm:$0xff]
    %v38 = vld [vmem:[%s1 + $0x80] sm:$0xff]
    %v39 = vld [vmem:[%s1 + $0x88] sm:$0xff]
    %v40 = vld [vmem:[%s1 + $0x90] sm:$0xff]
    %v41 = vld [vmem:[%s1 + $0x98] sm:$0xff]
    %v42 = vld [vmem:[%s1 + $0xa0] sm:$0xff]
    %v43 = vld [vmem:[%s1 + $0xa8] sm:$0xff]
    %v44 = vld [vmem:[%s1 + $0xb0] sm:$0xff]
    %v45 = vld [vmem:[%s1 + $0xb8] sm:$0xff]
    %v46 = vld [vmem:[%s1 + $0xc0] sm:$0xff]
    %v47 = vld [vmem:[%s1 + $0xc8] sm:$0xff]
    %v48 = vld [vmem:[%s1 + $0xd0] sm:$0xff]
    %v49 = vld [vmem:[%s1 + $0xd8] sm:$0xff]
    %v50 = vld [vmem:[%s1 + $0xe0] sm:$0xff]
    %v51 = vld [vmem:[%s1 + $0xe8] sm:$0xff]
    %v52 = vld [vmem:[%s1 + $0xf0] sm:$0xff]
    %v53 = vld [vmem:[%s1 + $0xf8] sm:$0xff]
    %v54 = vld [vmem:[%s0] sm:$0xff]
    %v55 = vld [vmem:[%s0 + $0x8] sm:$0xff]
    %v56 = vld [vmem:[%s0 + $0x10] sm:$0xff]
    %v57 = vld [vmem:[%s0 + $0x18] sm:$0xff]
    %v58 = vld [vmem:[%s2] sm:$0xff]
    %v59 = vld [vmem:[%s2 + $0x8] sm:$0xff]
    %v60 = vld [vmem:[%s2 + $0x10] sm:$0xff]
    %v61 = vld [vmem:[%s2 + $0x18] sm:$0xff]
    %v62 = vld [vmem:[%s2 + $0x20] sm:$0xff]
    %v63 = vld [vmem:[%s2 + $0x28] sm:$0xff]
    %v64 = vld [vmem:[%s2 + $0x30] sm:$0xff]
    %v65 = vld [vmem:[%s2 + $0x38] sm:$0xff]
    %v66 = vld [vmem:[%s2 + $0x40] sm:$0xff]
    %v67 = vld [vmem:[%s2 + $0x48] sm:$0xff]
    %v68 = vld [vmem:[%s2 + $0x50] sm:$0xff]
    %v69 = vld [vmem:[%s2 + $0x58] sm:$0xff]
    %v70 = vld [vmem:[%s2 + $0x60] sm:$0xff]
    %v71 = vld [vmem:[%s2 + $0x68] sm:$0xff]
    %v72 = vld [vmem:[%s2 + $0x70] sm:$0xff]
    %v73 = vld [vmem:[%s2 + $0x78] sm:$0xff]
    %v74 = vld [vmem:[%s2 + $0x80] sm:$0xff]
    %v75 = vld [vmem:[%s2 + $0x88] sm:$0xff]
    %v76 = vld [vmem:[%s2 + $0x90] sm:$0xff]
    %v77 = vld [vmem:[%s2 + $0x98] sm:$0xff]
    %v78 = vld [vmem:[%s2 + $0xa0] sm:$0xff]
    %v79 = vld [vmem:[%s2 + $0xa8] sm:$0xff]
    %v80 = vld [vmem:[%s2 + $0xb0] sm:$0xff]
    %v81 = vld [vmem:[%s2 + $0xb8] sm:$0xff]
    %v82 = vld [vmem:[%s2 + $0xc0] sm:$0xff]
    %v83 = vld [vmem:[%s2 + $0xc8] sm:$0xff]
    %v84 = vld [vmem:[%s2 + $0xd0] sm:$0xff]
    %v85 = vld [vmem:[%s2 + $0xd8] sm:$0xff]
    %v86 = vld [vmem:[%s2 + $0xe0] sm:$0xff]
    %v87 = vld [vmem:[%s2 + $0xe8] sm:$0xff]
    %v88 = vld [vmem:[%s2 + $0xf0] sm:$0xff]
    %v89 = vld [vmem:[%s2 + $0xf8] sm:$0xff]
    %91 = vset.pattern.permute.xlu0 0
    %92 = vperm.xlu0 %91, %v58
    %v93 = vpop.permute.xlu0 %92
    %96 = vset.pattern.permute.xlu0 0
    %97 = vperm.xlu0 %96, %v59
    %v98 = vpop.permute.xlu0 %97
    %101 = vset.pattern.permute.xlu0 0
    %102 = vperm.xlu0 %101, %v60
    %v103 = vpop.permute.xlu0 %102
    %106 = vset.pattern.permute.xlu0 0
    %107 = vperm.xlu0 %106, %v61
    %v108 = vpop.permute.xlu0 %107
    %111 = vset.pattern.permute.xlu0 0
    %112 = vperm.xlu0 %111, %v62
    %v113 = vpop.permute.xlu0 %112
    %116 = vset.pattern.permute.xlu0 0
    %117 = vperm.xlu0 %116, %v63
    %v118 = vpop.permute.xlu0 %117
    %121 = vset.pattern.permute.xlu0 0
    %122 = vperm.xlu0 %121, %v64
    %v123 = vpop.permute.xlu0 %122
    %126 = vset.pattern.permute.xlu0 0
    %127 = vperm.xlu0 %126, %v65
    %v128 = vpop.permute.xlu0 %127
    %131 = vset.pattern.permute.xlu0 0
    %132 = vperm.xlu0 %131, %v66
    %v133 = vpop.permute.xlu0 %132
    %136 = vset.pattern.permute.xlu0 0
    %137 = vperm.xlu0 %136, %v67
    %v138 = vpop.permute.xlu0 %137
    %141 = vset.pattern.permute.xlu0 0
    %142 = vperm.xlu0 %141, %v68
    %v143 = vpop.permute.xlu0 %142
    %146 = vset.pattern.permute.xlu0 0
    %147 = vperm.xlu0 %146, %v69
    %v148 = vpop.permute.xlu0 %147
    %151 = vset.pattern.permute.xlu0 0
    %152 = vperm.xlu0 %151, %v70
    %v153 = vpop.permute.xlu0 %152
    %156 = vset.pattern.permute.xlu0 0
    %157 = vperm.xlu0 %156, %v71
    %v158 = vpop.permute.xlu0 %157
    %161 = vset.pattern.permute.xlu0 0
    %162 = vperm.xlu0 %161, %v72
    %v163 = vpop.permute.xlu0 %162
    %166 = vset.pattern.permute.xlu0 0
    %167 = vperm.xlu0 %166, %v73
    %v168 = vpop.permute.xlu0 %167
    %171 = vset.pattern.permute.xlu0 0
    %172 = vperm.xlu0 %171, %v74
    %v173 = vpop.permute.xlu0 %172
    %176 = vset.pattern.permute.xlu0 0
    %177 = vperm.xlu0 %176, %v75
    %v178 = vpop.permute.xlu0 %177
    %181 = vset.pattern.permute.xlu0 0
    %182 = vperm.xlu0 %181, %v76
    %v183 = vpop.permute.xlu0 %182
    %186 = vset.pattern.permute.xlu0 0
    %187 = vperm.xlu0 %186, %v77
    %v188 = vpop.permute.xlu0 %187
    %191 = vset.pattern.permute.xlu0 0
    %192 = vperm.xlu0 %191, %v78
    %v193 = vpop.permute.xlu0 %192
    %196 = vset.pattern.permute.xlu0 0
    %197 = vperm.xlu0 %196, %v79
    %v198 = vpop.permute.xlu0 %197
    %201 = vset.pattern.permute.xlu0 0
    %202 = vperm.xlu0 %201, %v80
    %v203 = vpop.permute.xlu0 %202
    %206 = vset.pattern.permute.xlu0 0
    %207 = vperm.xlu0 %206, %v81
    %v208 = vpop.permute.xlu0 %207
    %211 = vset.pattern.permute.xlu0 0
    %212 = vperm.xlu0 %211, %v82
    %v213 = vpop.permute.xlu0 %212
    %216 = vset.pattern.permute.xlu0 0
    %217 = vperm.xlu0 %216, %v83
    %v218 = vpop.permute.xlu0 %217
    %221 = vset.pattern.permute.xlu0 0
    %222 = vperm.xlu0 %221, %v84
    %v223 = vpop.permute.xlu0 %222
    %226 = vset.pattern.permute.xlu0 0
    %227 = vperm.xlu0 %226, %v85
    %v228 = vpop.permute.xlu0 %227
    %231 = vset.pattern.permute.xlu0 0
    %232 = vperm.xlu0 %231, %v86
    %v233 = vpop.permute.xlu0 %232
    %236 = vset.pattern.permute.xlu0 0
    %237 = vperm.xlu0 %236, %v87
    %v238 = vpop.permute.xlu0 %237
    %241 = vset.pattern.permute.xlu0 0
    %242 = vperm.xlu0 %241, %v88
    %v243 = vpop.permute.xlu0 %242
    %246 = vset.pattern.permute.xlu0 0
    %247 = vperm.xlu0 %246, %v89
    %v248 = vpop.permute.xlu0 %247
    %vm250 = vcmask 261120
    %v252 = vsel %vm250, %v22, 0
    %v255 = vsel %vm250, %v23, 0
    %v258 = vsel %vm250, %v24, 0
    %v261 = vsel %vm250, %v25, 0
    %v264 = vsel %vm250, %v26, 0
    %v267 = vsel %vm250, %v27, 0
    %v270 = vsel %vm250, %v28, 0
    %v273 = vsel %vm250, %v29, 0
    %v276 = vsel %vm250, %v30, 0
    %v279 = vsel %vm250, %v31, 0
    %v282 = vsel %vm250, %v32, 0
    %v285 = vsel %vm250, %v33, 0
    %v288 = vsel %vm250, %v34, 0
    %v291 = vsel %vm250, %v35, 0
    %v294 = vsel %vm250, %v36, 0
    %v297 = vsel %vm250, %v37, 0
    %v300 = vsel %vm250, %v38, 0
    %v303 = vsel %vm250, %v39, 0
    %v306 = vsel %vm250, %v40, 0
    %v309 = vsel %vm250, %v41, 0
    %v312 = vsel %vm250, %v42, 0
    %v315 = vsel %vm250, %v43, 0
    %v318 = vsel %vm250, %v44, 0
    %v321 = vsel %vm250, %v45, 0
    %v324 = vsel %vm250, %v46, 0
    %v327 = vsel %vm250, %v47, 0
    %v330 = vsel %vm250, %v48, 0
    %v333 = vsel %vm250, %v49, 0
    %v336 = vsel %vm250, %v50, 0
    %v339 = vsel %vm250, %v51, 0
    %v342 = vsel %vm250, %v52, 0
    %v345 = vsel %vm250, %v53, 0
    %347 = vmatpush.msra.mxu0 0.0
    %348 = vmatpush.msra.mxu0 0.0
    %349 = vmatpush.msra.mxu0 0.0
    %350 = vmatpush.msra.mxu0 0.0
    %351 = vmatpush.msra.mxu0 0.0
    %352 = vmatpush.msra.mxu0 0.0
    %353 = vmatpush.msra.mxu0 0.0
    %354 = vmatpush.msra.mxu0 0.0
    %355 = vmatpush.msra.mxu0 0.0
    %356 = vmatpush.msra.mxu0 0.0
    %357 = vmatpush.msra.mxu0 0.0
    %358 = vmatpush.msra.mxu0 0.0
    %359 = vmatpush.msra.mxu0 %v57
    %360 = vmatpush.msra.mxu0 %v56
    %361 = vmatpush.msra.mxu0 %v55
    %362 = vmatpush.msra.mxu0 %v54
    %363 = vmatmul.f32.gmra.mxu0 %v252
    %v364 = vpop.f32.mrf.mxu0
    %v365 = vadd.f32 %v93, %v364
    %366 = vmatmul.f32.gmra.mxu0 %v255
    %v367 = vpop.f32.mrf.mxu0
    %v368 = vadd.f32 %v98, %v367
    %369 = vmatmul.f32.gmra.mxu0 %v258
    %v370 = vpop.f32.mrf.mxu0
    %v371 = vadd.f32 %v103, %v370
    %372 = vmatmul.f32.gmra.mxu0 %v261
    %v373 = vpop.f32.mrf.mxu0
    %v374 = vadd.f32 %v108, %v373
    %375 = vmatmul.f32.gmra.mxu0 %v264
    %v376 = vpop.f32.mrf.mxu0
    %v377 = vadd.f32 %v113, %v376
    %378 = vmatmul.f32.gmra.mxu0 %v267
    %v379 = vpop.f32.mrf.mxu0
    %v380 = vadd.f32 %v118, %v379
    %381 = vmatmul.f32.gmra.mxu0 %v270
    %v382 = vpop.f32.mrf.mxu0
    %v383 = vadd.f32 %v123, %v382
    %384 = vmatmul.f32.gmra.mxu0 %v273
    %v385 = vpop.f32.mrf.mxu0
    %v386 = vadd.f32 %v128, %v385
    %387 = vmatmul.f32.gmra.mxu0 %v276
    %v388 = vpop.f32.mrf.mxu0
    %v389 = vadd.f32 %v133, %v388
    %390 = vmatmul.f32.gmra.mxu0 %v279
    %v391 = vpop.f32.mrf.mxu0
    %v392 = vadd.f32 %v138, %v391
    %393 = vmatmul.f32.gmra.mxu0 %v282
    %v394 = vpop.f32.mrf.mxu0
    %v395 = vadd.f32 %v143, %v394
    %396 = vmatmul.f32.gmra.mxu0 %v285
    %v397 = vpop.f32.mrf.mxu0
    %v398 = vadd.f32 %v148, %v397
    %399 = vmatmul.f32.gmra.mxu0 %v288
    %v400 = vpop.f32.mrf.mxu0
    %v401 = vadd.f32 %v153, %v400
    %402 = vmatmul.f32.gmra.mxu0 %v291
    %v403 = vpop.f32.mrf.mxu0
    %v404 = vadd.f32 %v158, %v403
    %405 = vmatmul.f32.gmra.mxu0 %v294
    %v406 = vpop.f32.mrf.mxu0
    %v407 = vadd.f32 %v163, %v406
    %408 = vmatmul.f32.gmra.mxu0 %v297
    %v409 = vpop.f32.mrf.mxu0
    %v410 = vadd.f32 %v168, %v409
    %411 = vmatmul.f32.gmra.mxu0 %v300
    %v412 = vpop.f32.mrf.mxu0
    %v413 = vadd.f32 %v173, %v412
    %414 = vmatmul.f32.gmra.mxu0 %v303
    %v415 = vpop.f32.mrf.mxu0
    %v416 = vadd.f32 %v178, %v415
    %417 = vmatmul.f32.gmra.mxu0 %v306
    %v418 = vpop.f32.mrf.mxu0
    %v419 = vadd.f32 %v183, %v418
    %420 = vmatmul.f32.gmra.mxu0 %v309
    %v421 = vpop.f32.mrf.mxu0
    %v422 = vadd.f32 %v188, %v421
    %423 = vmatmul.f32.gmra.mxu0 %v312
    %v424 = vpop.f32.mrf.mxu0
    %v425 = vadd.f32 %v193, %v424
    %426 = vmatmul.f32.gmra.mxu0 %v315
    %v427 = vpop.f32.mrf.mxu0
    %v428 = vadd.f32 %v198, %v427
    %429 = vmatmul.f32.gmra.mxu0 %v318
    %v430 = vpop.f32.mrf.mxu0
    %v431 = vadd.f32 %v203, %v430
    %432 = vmatmul.f32.gmra.mxu0 %v321
    %v433 = vpop.f32.mrf.mxu0
    %v434 = vadd.f32 %v208, %v433
    %435 = vmatmul.f32.gmra.mxu0 %v324
    %v436 = vpop.f32.mrf.mxu0
    %v437 = vadd.f32 %v213, %v436
    %438 = vmatmul.f32.gmra.mxu0 %v327
    %v439 = vpop.f32.mrf.mxu0
    %v440 = vadd.f32 %v218, %v439
    %441 = vmatmul.f32.gmra.mxu0 %v330
    %v442 = vpop.f32.mrf.mxu0
    %v443 = vadd.f32 %v223, %v442
    %444 = vmatmul.f32.gmra.mxu0 %v333
    %v445 = vpop.f32.mrf.mxu0
    %v446 = vadd.f32 %v228, %v445
    %447 = vmatmul.f32.gmra.mxu0 %v336
    %v448 = vpop.f32.mrf.mxu0
    %v449 = vadd.f32 %v233, %v448
    %450 = vmatmul.f32.gmra.mxu0 %v339
    %v451 = vpop.f32.mrf.mxu0
    %v452 = vadd.f32 %v238, %v451
    %453 = vmatmul.f32.gmra.mxu0 %v342
    %v454 = vpop.f32.mrf.mxu0
    %v455 = vadd.f32 %v243, %v454
    %456 = vmatmul.f32.gmra.mxu0 %v345
    %v457 = vpop.f32.mrf.mxu0
    %v458 = vadd.f32 %v248, %v457
    %459 = vdwg.mxu0
    %v460 = vmax.f32 %v365, 0.0
    %v461 = vmax.f32 %v368, 0.0
    %v462 = vmax.f32 %v371, 0.0
    %v463 = vmax.f32 %v374, 0.0
    %v464 = vmax.f32 %v377, 0.0
    %v465 = vmax.f32 %v380, 0.0
    %v466 = vmax.f32 %v383, 0.0
    %v467 = vmax.f32 %v386, 0.0
    %v468 = vmax.f32 %v389, 0.0
    %v469 = vmax.f32 %v392, 0.0
    %v470 = vmax.f32 %v395, 0.0
    %v471 = vmax.f32 %v398, 0.0
    %v472 = vmax.f32 %v401, 0.0
    %v473 = vmax.f32 %v404, 0.0
    %v474 = vmax.f32 %v407, 0.0
    %v475 = vmax.f32 %v410, 0.0
    %v476 = vmax.f32 %v413, 0.0
    %v477 = vmax.f32 %v416, 0.0
    %v478 = vmax.f32 %v419, 0.0
    %v479 = vmax.f32 %v422, 0.0
    %v480 = vmax.f32 %v425, 0.0
    %v481 = vmax.f32 %v428, 0.0
    %v482 = vmax.f32 %v431, 0.0
    %v483 = vmax.f32 %v434, 0.0
    %v484 = vmax.f32 %v437, 0.0
    %v485 = vmax.f32 %v440, 0.0
    %v486 = vmax.f32 %v443, 0.0
    %v487 = vmax.f32 %v446, 0.0
    %v488 = vmax.f32 %v449, 0.0
    %v489 = vmax.f32 %v452, 0.0
    %v490 = vmax.f32 %v455, 0.0
    %v491 = vmax.f32 %v458, 0.0
    %v492 = vld [vmem:[%s3] sm:$0x3]
    %s493 = sld [smem:[#allocation2]]
    %v494 = vstv %s493
    %v496 = vperm.slane %v492, 0
    %v497 = vperm.slane %v492, 1
    %500 = vmatpush.msra.mxu0 %v475
    %501 = vmatpush.msra.mxu0 %v474
    %502 = vmatpush.msra.mxu0 %v473
    %503 = vmatpush.msra.mxu0 %v472
    %504 = vmatpush.msra.mxu0 %v471
    %505 = vmatpush.msra.mxu0 %v470
    %506 = vmatpush.msra.mxu0 %v469
    %507 = vmatpush.msra.mxu0 %v468
    %508 = vmatpush.msra.mxu0 %v467
    %509 = vmatpush.msra.mxu0 %v466
    %510 = vmatpush.msra.mxu0 %v465
    %511 = vmatpush.msra.mxu0 %v464
    %512 = vmatpush.msra.mxu0 %v463
    %513 = vmatpush.msra.mxu0 %v462
    %514 = vmatpush.msra.mxu0 %v461
    %515 = vmatpush.msra.mxu0 %v460
    %516 = vmatmul.f32.gmra.mxu0 %v496
    %v517 = vpop.f32.mrf.mxu0
    %v518 = vadd.f32 %v494, %v517
    %519 = vdwg.mxu0
    %520 = vmatpush.msra.mxu0 %v491
    %521 = vmatpush.msra.mxu0 %v490
    %522 = vmatpush.msra.mxu0 %v489
    %523 = vmatpush.msra.mxu0 %v488
    %524 = vmatpush.msra.mxu0 %v487
    %525 = vmatpush.msra.mxu0 %v486
    %526 = vmatpush.msra.mxu0 %v485
    %527 = vmatpush.msra.mxu0 %v484
    %528 = vmatpush.msra.mxu0 %v483
    %529 = vmatpush.msra.mxu0 %v482
    %530 = vmatpush.msra.mxu0 %v481
    %531 = vmatpush.msra.mxu0 %v480
    %532 = vmatpush.msra.mxu0 %v479
    %533 = vmatpush.msra.mxu0 %v478
    %534 = vmatpush.msra.mxu0 %v477
    %535 = vmatpush.msra.mxu0 %v476
    %536 = vmatmul.f32.gmra.mxu0 %v497
    %v537 = vpop.f32.mrf.mxu0
    %v538 = vadd.f32 %v518, %v537
    %539 = vdwg.mxu0
    %v540 = vmax.f32 %v538, 0.0
    %vm541 = vcmask 57344
    %542 = vst.msk [vmem:[#allocation3] sm:$0x1] %vm541, %v540
    // Predicated region
    $region22: #{tpu_custom_call.1} parent=1 // pred_check
      _
    $region23: #{tpu_custom_call.1} parent=1 // pred_check_branch
      %544 = sbr.rel (0) target = $region25
    $region24: #{tpu_custom_call.1} parent=1 // pred_region
      %546 = vsyncadd [#allocation4], 0
      %s548 = sshll.u32 [#allocation3], 4
      %s549 = int_to_ptr.vmem [resolvable:$true] %s548
      %s550 = sshll.u32 %s5, 4
      %s551 = int_to_ptr.hbm [resolvable:$true] %s550
      %553 = dma.vmem_to_hbm [thread:$0]  %s549, 16, %s551, [#allocation4]
    $region25: #{tpu_custom_call.1} parent=1 // pred_fallthru
      _
    // Predicated region
    $region26: #{tpu_custom_call.1} parent=1 // pred_check
      _
    $region27: #{tpu_custom_call.1} parent=1 // pred_check_branch
      %555 = sbr.rel (0) target = $region29
    $region28: #{tpu_custom_call.1} parent=1 // pred_region
      %557 = dma.done [#allocation4], 16
    $region29: #{tpu_custom_call.1} parent=1 // pred_fallthru
      _
    %558 = vsyncpa [#allocation4], 1

</llo_original>
